<compile_context>
chip_gen: v7x
topology: tpu7x:2x2x1
jax: 0.10.0
libtpu: 0.0.40
codegen_flags: <defaults>
</compile_context>

<pallas_src>
import functools

import jax
import jax.numpy as jnp
from jax.experimental import pallas as pl
from jax.experimental.pallas import tpu as pltpu

_LANE = 128
_ALIGN_ROWS = 8          # kernel main region aligned to 8 * 128 = 1024 elements
_MAX_TILE_ROWS = 2048    # (2048, 128) f32 tile = 1 MiB
_NUM_SLICES = 2          # leading "parallel" grid axis (both TensorCores on v7x)


def _round_up(x, m):
    return (x + m - 1) // m * m


def _as_bool(m):
    return m if m.dtype == jnp.bool_ else (m != 0)


def _masked_mse_kernel(pred_ref, true_ref, mask_ref, sum_ref, cnt_ref,
                       sum_acc, cnt_acc, *, rows):
    j = pl.program_id(0)            # parallel slice (megacore sharding on v7x)
    k = pl.program_id(1)            # sequential reduction axis
    nk = pl.num_programs(1)

    @pl.when(k == 0)
    def _init():
        sum_acc[...] = jnp.zeros_like(sum_acc)
        cnt_acc[...] = jnp.zeros_like(cnt_acc)

    tile_rows, lanes = pred_ref.shape

    # Scalar row bound for this tile: handles (a) the ragged last tile (rows
    # past `rows` hold unspecified VMEM data -- never rely on zeros) and
    # (b) phantom tiles of the parallel split (index_map clamps them onto the
    # last real tile; valid_rows == 0 so they contribute nothing).
    tile_id = j * nk + k
    valid_rows = jnp.clip(rows - tile_id * tile_rows, 0, tile_rows)
    row_ok = jax.lax.broadcasted_iota(jnp.int32, (tile_rows, lanes), 0) < valid_rows

    m = jnp.logical_and(_as_bool(mask_ref[...]), row_ok)
    d = pred_ref[...].astype(jnp.float32) - true_ref[...].astype(jnp.float32)
    # where() (a select), not a multiply: invalid rows may hold NaN/Inf garbage
    # which must not propagate.
    sq = jnp.where(m, d * d, 0.0)
    cnt = m.astype(jnp.float32)      # f32 count: fine for a mean denominator

    # Collapse the tile to a single (8, 128) vreg.  Rows 8g+s live on sublane
    # s, so the axis-0 sum is pure VPU vector adds (no XLU), and the per-step
    # scratch traffic is one vreg load + store per accumulator.
    sum_acc[...] += jnp.sum(sq.reshape(tile_rows // 8, 8, lanes), axis=0)
    cnt_acc[...] += jnp.sum(cnt.reshape(tile_rows // 8, 8, lanes), axis=0)

    @pl.when(k == nk - 1)
    def _finalize():
        sum_ref[...] = jnp.sum(sum_acc[...]).reshape(1, 1, 1)
        cnt_ref[...] = jnp.sum(cnt_acc[...]).reshape(1, 1, 1)


@jax.jit
def masked_mse_loss(y_pred, y_true, mask):
    """Masked MSE: mean((y_pred - y_true)**2) over elements where mask."""
    assert y_pred.shape == y_true.shape == mask.shape
    total = y_pred.size
    assert total > 0

    # ravel of contiguous data is free (bitcast); no dtype conversion passes.
    pf, tf, mf = jnp.ravel(y_pred), jnp.ravel(y_true), jnp.ravel(mask)

    rows = (total // (_ALIGN_ROWS * _LANE)) * _ALIGN_ROWS
    main = rows * _LANE
    tail = total - main

    # Tail (< 1024 elements): tiny jnp reduction in the wrapper, added to the
    # kernel's partials.  This is what removes the old full-array jnp.pad.
    if tail:
        mt = _as_bool(mf[main:])
        dt = pf[main:].astype(jnp.float32) - tf[main:].astype(jnp.float32)
        tail_sum = jnp.sum(jnp.where(mt, dt * dt, 0.0))
        tail_cnt = jnp.sum(mt.astype(jnp.float32))
    else:
        tail_sum = jnp.float32(0.0)
        tail_cnt = jnp.float32(0.0)

    if rows == 0:
        # Tiny input: everything handled by the tail path (no kernel launch).
        return (tail_sum / tail_cnt).astype(y_pred.dtype)

    # Lane-dense (rows, 128) slab.  When total is 1024-aligned this is a free
    # reshape of the whole array (no copy, no pad); otherwise only the aligned
    # prefix is sliced.
    # TODO(synk): if HLO shows the unaligned-prefix slice materializing a
    # copy, route the producers through CompilerParams(allow_input_fusion=...).
    if tail:
        p2 = pf[:main].reshape(rows, _LANE)
        t2 = tf[:main].reshape(rows, _LANE)
        m2 = mf[:main].reshape(rows, _LANE)
    else:
        p2 = pf.reshape(rows, _LANE)
        t2 = tf.reshape(rows, _LANE)
        m2 = mf.reshape(rows, _LANE)

    tile_rows = min(rows, _MAX_TILE_ROWS)
    num_tiles = pl.cdiv(rows, tile_rows)
    num_slices = min(_NUM_SLICES, num_tiles)
    if num_slices > 1 and num_tiles % num_slices:
        # Re-derive the tile size so the tile count splits evenly across the
        # parallel slices (avoids a phantom tile re-reading HBM on one core).
        # 32-row multiples satisfy the sublane tiling of every input dtype
        # (f32/int32: 8, bf16: 16, bool/int8: 32).
        target = _round_up(num_tiles, num_slices)
        tile_rows = min(_MAX_TILE_ROWS, _round_up(pl.cdiv(rows, target), 32))
        num_tiles = pl.cdiv(rows, tile_rows)
    tiles_per_slice = pl.cdiv(num_tiles, num_slices)

    def in_map(j, k):
        # Clamp (rare) phantom tiles onto the last real tile; valid_rows == 0
        # in-kernel zeroes their contribution.
        return (jnp.minimum(j * tiles_per_slice + k, num_tiles - 1), 0)

    tile_spec = pl.BlockSpec((tile_rows, _LANE), in_map)
    out_spec = pl.BlockSpec((1, 1, 1), lambda j, k: (j, 0, 0))

    s, c = pl.pallas_call(
        functools.partial(_masked_mse_kernel, rows=rows),
        out_shape=(
            jax.ShapeDtypeStruct((num_slices, 1, 1), jnp.float32),
            jax.ShapeDtypeStruct((num_slices, 1, 1), jnp.float32),
        ),
        grid_spec=pltpu.PrefetchScalarGridSpec(
            num_scalar_prefetch=0,
            grid=(num_slices, tiles_per_slice),
            in_specs=[tile_spec, tile_spec, tile_spec],
            out_specs=(out_spec, out_spec),
            scratch_shapes=[
                pltpu.VMEM((8, _LANE), jnp.float32),
                pltpu.VMEM((8, _LANE), jnp.float32),
            ],
        ),
        compiler_params=pltpu.CompilerParams(
            dimension_semantics=("parallel", "arbitrary")),
    )(p2, t2, m2)

    # Mean over the selected elements; 0/0 = NaN when mask is all-False,
    # matching torch's MSELoss over an empty masked_select.
    return ((jnp.sum(s) + tail_sum) / (jnp.sum(c) + tail_cnt)).astype(
        y_pred.dtype)


def _ref(y_pred, y_true, mask):
    m = _as_bool(mask)
    d = y_pred.astype(jnp.float32) - y_true.astype(jnp.float32)
    return jnp.sum(jnp.where(m, d * d, 0.0)) / jnp.sum(m.astype(jnp.float32))


if __name__ == "__main__":
    key = jax.random.PRNGKey(0)

    # (shape, mask dtype, rtol): cases exercise single-tile, wrapper-tail,
    # multi-slice + ragged-last-tile, and odd->even tile re-split paths.
    cases = [
        ((2, 4, 16, 16), jnp.bool_, 1e-5),    # 2048 elems: 1 tile, no tail
        ((2, 4, 100, 170), jnp.int32, 1e-3),  # 136000: tail=832, int mask
        ((3, 7, 100, 128), jnp.bool_, 1e-3),  # 268800: 2 slices, ragged tile
        ((5, 8, 128, 128), jnp.bool_, 1e-3),  # 655360: odd tiles -> re-split
    ]
    for shape, mdtype, rtol in cases:
        key, k1, k2, k3 = jax.random.split(key, 4)
        y_pred = jax.random.normal(k1, shape, dtype=jnp.float32)
        y_true = jax.random.normal(k2, shape, dtype=jnp.float32)
        mask = jax.random.bernoulli(k3, p=0.5, shape=shape)   # bool, as in spec
        if mdtype != jnp.bool_:
            mask = mask.astype(mdtype)

        loss = masked_mse_loss(y_pred, y_true, mask)
        jax.block_until_ready(loss)

        ref = _ref(y_pred, y_true, mask)
        assert jnp.allclose(loss, ref, rtol=rtol, atol=1e-6), (shape, loss, ref)

    print("KERNEL_OK")
</pallas_src>

<mosaic_0001>
module attributes {stable_mosaic.version = 11 : i64} {
  func.func @_masked_mse_kernel(%arg0: i32, %arg1: i32, %arg2: memref<16x128xf32, #tpu.memory_space<vmem>>, %arg3: memref<16x128xf32, #tpu.memory_space<vmem>>, %arg4: memref<16x128xi32, #tpu.memory_space<vmem>>, %arg5: memref<1x1x1xf32, #tpu.memory_space<vmem>>, %arg6: memref<1x1x1xf32, #tpu.memory_space<vmem>>, %arg7: memref<8x128xf32, #tpu.memory_space<vmem>>, %arg8: memref<8x128xf32, #tpu.memory_space<vmem>>) attributes {dimension_semantics = [#tpu.dimension_semantics<parallel>, #tpu.dimension_semantics<arbitrary>], iteration_bounds = array<i64: 1, 1>, scalar_prefetch = 0 : i64, scratch_operands = 2 : i64, tpu.core_type = #tpu.core_type<tc>, window_params = [{transform_indices = @transform_0, window_bounds = array<i64: 16, 128>}, {transform_indices = @transform_1, window_bounds = array<i64: 16, 128>}, {transform_indices = @transform_2, window_bounds = array<i64: 16, 128>}, {transform_indices = @transform_3, window_bounds = array<i64: 1, 1, 1>}, {transform_indices = @transform_4, window_bounds = array<i64: 1, 1, 1>}]} {
    %c0_i32 = arith.constant 0 : i32
    %0 = arith.cmpi eq, %arg1, %c0_i32 : i32
    %1 = arith.extui %0 : i1 to i32
    %c0_i32_0 = arith.constant 0 : i32
    %2 = arith.cmpi ne, %1, %c0_i32_0 : i32
    scf.if %2 {
      %cst_22 = arith.constant 0.000000e+00 : f32
      %36 = vector.broadcast %cst_22 : f32 to vector<8x128xf32>
      %c0_23 = arith.constant 0 : index
      %c0_24 = arith.constant 0 : index
      %37 = vector.load %arg7[%c0_23, %c0_24] : memref<8x128xf32, #tpu.memory_space<vmem>>, vector<8x128xf32>
      tpu.vector_store %arg7[%c0_23, %c0_24], %36 {strides = array<i32>} : memref<8x128xf32, #tpu.memory_space<vmem>>, vector<8x128xf32>,
      %cst_25 = arith.constant 0.000000e+00 : f32
      %38 = vector.broadcast %cst_25 : f32 to vector<8x128xf32>
      %c0_26 = arith.constant 0 : index
      %c0_27 = arith.constant 0 : index
      %39 = vector.load %arg8[%c0_26, %c0_27] : memref<8x128xf32, #tpu.memory_space<vmem>>, vector<8x128xf32>
      tpu.vector_store %arg8[%c0_26, %c0_27], %38 {strides = array<i32>} : memref<8x128xf32, #tpu.memory_space<vmem>>, vector<8x128xf32>,
    } else {
    }
    %c1_i32 = arith.constant 1 : i32
    %3 = arith.muli %arg0, %c1_i32 : i32
    %4 = arith.addi %3, %arg1 : i32
    %c16_i32 = arith.constant 16 : i32
    %5 = arith.muli %4, %c16_i32 : i32
    %c16_i32_1 = arith.constant 16 : i32
    %6 = arith.subi %c16_i32_1, %5 : i32
    %c0_i32_2 = arith.constant 0 : i32
    %c16_i32_3 = arith.constant 16 : i32
    %7 = arith.maxsi %c0_i32_2, %6 : i32
    %8 = arith.minsi %c16_i32_3, %7 : i32
    %9 = tpu.iota {dimensions = array<i32: 0>} : vector<16x128xi32>
    %10 = vector.broadcast %8 : i32 to vector<16x128xi32>
    %11 = arith.cmpi slt, %9, %10 : vector<16x128xi32>
    %c0 = arith.constant 0 : index
    %c0_4 = arith.constant 0 : index
    %12 = vector.load %arg4[%c0, %c0_4] : memref<16x128xi32, #tpu.memory_space<vmem>>, vector<16x128xi32>
    %cst = arith.constant dense<0> : vector<16x128xi32>
    %13 = arith.cmpi ne, %12, %cst : vector<16x128xi32>
    %14 = arith.andi %13, %11 : vector<16x128xi1>
    %c0_5 = arith.constant 0 : index
    %c0_6 = arith.constant 0 : index
    %15 = vector.load %arg2[%c0_5, %c0_6] : memref<16x128xf32, #tpu.memory_space<vmem>>, vector<16x128xf32>
    %c0_7 = arith.constant 0 : index
    %c0_8 = arith.constant 0 : index
    %16 = vector.load %arg3[%c0_7, %c0_8] : memref<16x128xf32, #tpu.memory_space<vmem>>, vector<16x128xf32>
    %17 = arith.subf %15, %16 : vector<16x128xf32>
    %18 = arith.mulf %17, %17 : vector<16x128xf32>
    %cst_9 = arith.constant 0.000000e+00 : f32
    %19 = vector.broadcast %cst_9 : f32 to vector<16x128xf32>
    %20 = arith.select %14, %18, %19 : vector<16x128xi1>, vector<16x128xf32>
    %21 = arith.extui %14 : vector<16x128xi1> to vector<16x128xi32>
    %22 = arith.sitofp %21 : vector<16x128xi32> to vector<16x128xf32>
    %c0_10 = arith.constant 0 : index
    %c0_11 = arith.constant 0 : index
    %23 = vector.load %arg7[%c0_10, %c0_11] : memref<8x128xf32, #tpu.memory_space<vmem>>, vector<8x128xf32>
    %24 = vector.shape_cast %20 : vector<16x128xf32> to vector<2x8x128xf32>
    %cst_12 = arith.constant dense<0.000000e+00> : vector<8x128xf32>
    %25 = vector.multi_reduction <add>, %24, %cst_12 [0] : vector<2x8x128xf32> to vector<8x128xf32>
    %26 = arith.addf %23, %25 : vector<8x128xf32>
    %c0_13 = arith.constant 0 : index
    %c0_14 = arith.constant 0 : index
    %27 = vector.load %arg7[%c0_13, %c0_14] : memref<8x128xf32, #tpu.memory_space<vmem>>, vector<8x128xf32>
    tpu.vector_store %arg7[%c0_13, %c0_14], %26 {strides = array<i32>} : memref<8x128xf32, #tpu.memory_space<vmem>>, vector<8x128xf32>,
    %c0_15 = arith.constant 0 : index
    %c0_16 = arith.constant 0 : index
    %28 = vector.load %arg8[%c0_15, %c0_16] : memref<8x128xf32, #tpu.memory_space<vmem>>, vector<8x128xf32>
    %29 = vector.shape_cast %22 : vector<16x128xf32> to vector<2x8x128xf32>
    %cst_17 = arith.constant dense<0.000000e+00> : vector<8x128xf32>
    %30 = vector.multi_reduction <add>, %29, %cst_17 [0] : vector<2x8x128xf32> to vector<8x128xf32>
    %31 = arith.addf %28, %30 : vector<8x128xf32>
    %c0_18 = arith.constant 0 : index
    %c0_19 = arith.constant 0 : index
    %32 = vector.load %arg8[%c0_18, %c0_19] : memref<8x128xf32, #tpu.memory_space<vmem>>, vector<8x128xf32>
    tpu.vector_store %arg8[%c0_18, %c0_19], %31 {strides = array<i32>} : memref<8x128xf32, #tpu.memory_space<vmem>>, vector<8x128xf32>,
    %c0_i32_20 = arith.constant 0 : i32
    %33 = arith.cmpi eq, %arg1, %c0_i32_20 : i32
    %34 = arith.extui %33 : i1 to i32
    %c0_i32_21 = arith.constant 0 : i32
    %35 = arith.cmpi ne, %34, %c0_i32_21 : i32
    scf.if %35 {
      %c0_22 = arith.constant 0 : index
      %c0_23 = arith.constant 0 : index
      %36 = vector.load %arg7[%c0_22, %c0_23] : memref<8x128xf32, #tpu.memory_space<vmem>>, vector<8x128xf32>
      %37 = vector.shape_cast %36 : vector<8x128xf32> to vector<1x8x128xf32>
      %cst_24 = arith.constant dense<0.000000e+00> : vector<1xf32>
      %38 = vector.multi_reduction <add>, %37, %cst_24 [1, 2] : vector<1x8x128xf32> to vector<1xf32>
      %39 = vector.shape_cast %38 : vector<1xf32> to vector<1x1x1xf32>
      %40 = vector.extract %39[0, 0, 0] : f32 from vector<1x1x1xf32>
      %41 = vector.broadcast %40 : f32 to vector<1x1x1xf32>
      %c0_25 = arith.constant 0 : index
      %c0_26 = arith.constant 0 : index
      %c0_27 = arith.constant 0 : index
      %42 = vector.load %arg5[%c0_25, %c0_26, %c0_27] : memref<1x1x1xf32, #tpu.memory_space<vmem>>, vector<1x1x1xf32>
      tpu.vector_store %arg5[%c0_25, %c0_26, %c0_27], %41 {strides = array<i32>} : memref<1x1x1xf32, #tpu.memory_space<vmem>>, vector<1x1x1xf32>,
      %c0_28 = arith.constant 0 : index
      %c0_29 = arith.constant 0 : index
      %43 = vector.load %arg8[%c0_28, %c0_29] : memref<8x128xf32, #tpu.memory_space<vmem>>, vector<8x128xf32>
      %44 = vector.shape_cast %43 : vector<8x128xf32> to vector<1x8x128xf32>
      %cst_30 = arith.constant dense<0.000000e+00> : vector<1xf32>
      %45 = vector.multi_reduction <add>, %44, %cst_30 [1, 2] : vector<1x8x128xf32> to vector<1xf32>
      %46 = vector.shape_cast %45 : vector<1xf32> to vector<1x1x1xf32>
      %47 = vector.extract %46[0, 0, 0] : f32 from vector<1x1x1xf32>
      %48 = vector.broadcast %47 : f32 to vector<1x1x1xf32>
      %c0_31 = arith.constant 0 : index
      %c0_32 = arith.constant 0 : index
      %c0_33 = arith.constant 0 : index
      %49 = vector.load %arg6[%c0_31, %c0_32, %c0_33] : memref<1x1x1xf32, #tpu.memory_space<vmem>>, vector<1x1x1xf32>
      tpu.vector_store %arg6[%c0_31, %c0_32, %c0_33], %48 {strides = array<i32>} : memref<1x1x1xf32, #tpu.memory_space<vmem>>, vector<1x1x1xf32>,
    } else {
    }
    return
  }
  func.func @transform_0(%arg0: i32, %arg1: i32) -> (i32, i32) {
    %c1_i32 = arith.constant 1 : i32
    %0 = arith.muli %arg0, %c1_i32 : i32
    %1 = arith.addi %0, %arg1 : i32
    %c0_i32 = arith.constant 0 : i32
    %2 = arith.minsi %1, %c0_i32 : i32
    %c0_i32_0 = arith.constant 0 : i32
    %c0_i32_1 = arith.constant 0 : i32
    return %2, %c0_i32_0 : i32, i32
  }
  func.func @transform_1(%arg0: i32, %arg1: i32) -> (i32, i32) {
    %c1_i32 = arith.constant 1 : i32
    %0 = arith.muli %arg0, %c1_i32 : i32
    %1 = arith.addi %0, %arg1 : i32
    %c0_i32 = arith.constant 0 : i32
    %2 = arith.minsi %1, %c0_i32 : i32
    %c0_i32_0 = arith.constant 0 : i32
    %c0_i32_1 = arith.constant 0 : i32
    return %2, %c0_i32_0 : i32, i32
  }
  func.func @transform_2(%arg0: i32, %arg1: i32) -> (i32, i32) {
    %c1_i32 = arith.constant 1 : i32
    %0 = arith.muli %arg0, %c1_i32 : i32
    %1 = arith.addi %0, %arg1 : i32
    %c0_i32 = arith.constant 0 : i32
    %2 = arith.minsi %1, %c0_i32 : i32
    %c0_i32_0 = arith.constant 0 : i32
    %c0_i32_1 = arith.constant 0 : i32
    return %2, %c0_i32_0 : i32, i32
  }
  func.func @transform_3(%arg0: i32, %arg1: i32) -> (i32, i32, i32) {
    %c0_i32 = arith.constant 0 : i32
    %c0_i32_0 = arith.constant 0 : i32
    %c0_i32_1 = arith.constant 0 : i32
    return %arg0, %c0_i32, %c0_i32_0 : i32, i32, i32
  }
  func.func @transform_4(%arg0: i32, %arg1: i32) -> (i32, i32, i32) {
    %c0_i32 = arith.constant 0 : i32
    %c0_i32_0 = arith.constant 0 : i32
    %c0_i32_1 = arith.constant 0 : i32
    return %arg0, %c0_i32, %c0_i32_0 : i32, i32, i32
  }
}

</mosaic_0001>

<llo_original>
// kernel: masked_mse_loss.1
$region0: #{masked_mse_loss.1}
  #allocation0 [shape = 'u32[]', space=smem, size = 0x4, offset = 0x4, fixed_abs, tag = 'smem constant byte address 0x4 - core index']
  #allocation1 [shape = 'u32[144,128]{1,0:T(1,128)}', space=vmem, size = 0x12000, scoped, tag = 'internal scratch']
  #allocation2 [shape = 'f32[8,128]{1,0:T(8,128)}', space=vmem, size = 0x1000, scoped, tag = 'scratch operand']
  #allocation3 [shape = 'f32[8,128]{1,0:T(8,128)}', space=vmem, size = 0x1000, scoped, tag = 'scratch operand']
  %s0 = inlined_call_operand.vmem [shape: f32[16,128], index: 0, kind: input, shape index: {}]
  %s1 = inlined_call_operand.vmem [shape: f32[16,128], index: 1, kind: input, shape index: {}]
  %s2 = inlined_call_operand.vmem [shape: s32[16,128], index: 2, kind: input, shape index: {}]
  %s3 = inlined_call_operand.hbm [shape: f32[1,1,1], index: 3, kind: output, shape index: {0}]
  %s4 = inlined_call_operand.hbm [shape: f32[1,1,1], index: 4, kind: output, shape index: {1}]
  %5 = xla_tuple %s3, %s4
  %s6 = sld [smem:[#allocation0]]
  $region38: #{masked_mse_loss.1} parent=0
    _
  %s8 = ssub.s32 1, %s6
  %s9 = scalar_select 0, %s8, %s6
  $region1: #{masked_mse_loss.1} parent=0
    #allocation4 [shape = 'u8[512]{0}', space=vmem, size = 0x400, scoped, tag = 'output window, operand 0, single buffered']
    #allocation5 [shape = 's32[1]{0}', space=sflag, size = 0x4, scoped, tag = 'scoped memory for masked_mse_loss.1']
    #allocation6 [shape = 'u8[512]{0}', space=vmem, size = 0x400, scoped, tag = 'output window, operand 1, single buffered']
    #allocation7 [shape = 's32[1]{0}', space=sflag, size = 0x4, scoped, tag = 'scoped memory for masked_mse_loss.1']
    %10 = vsyncpa [#allocation5], 0
    %11 = vsyncpa [#allocation7], 0
    // Predicated region
    $region2: #{masked_mse_loss.1} parent=1 // pred_check
      _
    $region3: #{masked_mse_loss.1} parent=1 // pred_check_branch
      %13 = sbr.rel (0) target = $region5
    $region4: #{masked_mse_loss.1} parent=1 // pred_region
      %s14 = sadd.s32 0, 0
      %p15 = scmp.lt.s32.totalorder %s14, 0
      %s16 = scalar_select %p15, %s14, 0
      %s17 = smul.u32 2, %s16
      %p18 = scmp.lt.s32.totalorder %s17, 1
      %s19 = scalar_select %p18, %s17, 1
      %s20 = smul.addr %s19, 8
      %s21 = scalar_lea.vmem %s0, %s20
      %s22 = sadd.s32 0, 0
      %p23 = scmp.lt.s32.totalorder %s22, 0
      %s24 = scalar_select %p23, %s22, 0
      %s25 = smul.u32 2, %s24
    $region5: #{masked_mse_loss.1} parent=1 // pred_fallthru
      _
    // Predicated region
    $region6: #{masked_mse_loss.1} parent=1 // pred_check
      _
    $region7: #{masked_mse_loss.1} parent=1 // pred_check_branch
      %27 = sbr.rel (0) target = $region9
    $region8: #{masked_mse_loss.1} parent=1 // pred_region
      %s28 = sadd.s32 0, 0
      %p29 = scmp.lt.s32.totalorder %s28, 0
      %s30 = scalar_select %p29, %s28, 0
      %s31 = smul.u32 2, %s30
      %p32 = scmp.lt.s32.totalorder %s31, 1
      %s33 = scalar_select %p32, %s31, 1
      %s34 = smul.addr %s33, 8
      %s35 = scalar_lea.vmem %s1, %s34
      %s36 = sadd.s32 0, 0
      %p37 = scmp.lt.s32.totalorder %s36, 0
      %s38 = scalar_select %p37, %s36, 0
      %s39 = smul.u32 2, %s38
    $region9: #{masked_mse_loss.1} parent=1 // pred_fallthru
      _
    // Predicated region
    $region10: #{masked_mse_loss.1} parent=1 // pred_check
      _
    $region11: #{masked_mse_loss.1} parent=1 // pred_check_branch
      %41 = sbr.rel (0) target = $region13
    $region12: #{masked_mse_loss.1} parent=1 // pred_region
      %s42 = sadd.s32 0, 0
      %p43 = scmp.lt.s32.totalorder %s42, 0
      %s44 = scalar_select %p43, %s42, 0
      %s45 = smul.u32 2, %s44
      %p46 = scmp.lt.s32.totalorder %s45, 1
      %s47 = scalar_select %p46, %s45, 1
      %s48 = smul.addr %s47, 8
      %s49 = scalar_lea.vmem %s2, %s48
      %s50 = sadd.s32 0, 0
      %p51 = scmp.lt.s32.totalorder %s50, 0
      %s52 = scalar_select %p51, %s50, 0
      %s53 = smul.u32 2, %s52
    $region13: #{masked_mse_loss.1} parent=1 // pred_fallthru
      _
    %s54 = sadd.s32 0, 0
    %p55 = scmp.lt.s32.totalorder %s54, 0
    %s56 = scalar_select %p55, %s54, 0
    %s57 = smul.u32 2, %s56
    %p58 = scmp.lt.s32.totalorder %s57, 1
    %s59 = scalar_select %p58, %s57, 1
    %s60 = smul.addr %s59, 8
    %s61 = scalar_lea.vmem %s0, %s60
    %s62 = sadd.s32 0, 0
    %p63 = scmp.lt.s32.totalorder %s62, 0
    %s64 = scalar_select %p63, %s62, 0
    %s65 = smul.u32 2, %s64
    %p66 = scmp.lt.s32.totalorder %s65, 1
    %s67 = scalar_select %p66, %s65, 1
    %s68 = smul.addr %s67, 8
    %s69 = scalar_lea.vmem %s1, %s68
    %s70 = sadd.s32 0, 0
    %p71 = scmp.lt.s32.totalorder %s70, 0
    %s72 = scalar_select %p71, %s70, 0
    %s73 = smul.u32 2, %s72
    %p74 = scmp.lt.s32.totalorder %s73, 1
    %s75 = scalar_select %p74, %s73, 1
    %s76 = smul.addr %s75, 8
    %s77 = scalar_lea.vmem %s2, %s76
    %s78 = sadd.s32 0, 0
    %p79 = scmp.lt.s32.totalorder %s78, 0
    %s80 = scalar_select %p79, %s78, 0
    %s81 = smul.u32 2, %s80
    %p82 = scmp.lt.s32.totalorder %s81, 1
    %s83 = scalar_select %p82, %s81, 1
    %s84 = smul.addr %s83, 8
    %s85 = scalar_lea.vmem %s0, %s84
    %s86 = sadd.s32 0, 0
    %p87 = scmp.lt.s32.totalorder %s86, 0
    %s88 = scalar_select %p87, %s86, 0
    %s89 = smul.u32 2, %s88
    %s90 = sadd.s32 0, 0
    %p91 = scmp.lt.s32.totalorder %s90, 0
    %s92 = scalar_select %p91, %s90, 0
    %s93 = smul.u32 2, %s92
    %p94 = scmp.lt.s32.totalorder %s93, 1
    %s95 = scalar_select %p94, %s93, 1
    %s96 = smul.addr %s95, 8
    %s97 = scalar_lea.vmem %s1, %s96
    %s98 = sadd.s32 0, 0
    %p99 = scmp.lt.s32.totalorder %s98, 0
    %s100 = scalar_select %p99, %s98, 0
    %s101 = smul.u32 2, %s100
    %s102 = sadd.s32 0, 0
    %p103 = scmp.lt.s32.totalorder %s102, 0
    %s104 = scalar_select %p103, %s102, 0
    %s105 = smul.u32 2, %s104
    %p106 = scmp.lt.s32.totalorder %s105, 1
    %s107 = scalar_select %p106, %s105, 1
    %s108 = smul.addr %s107, 8
    %s109 = scalar_lea.vmem %s2, %s108
    %s110 = sadd.s32 0, 0
    %p111 = scmp.lt.s32.totalorder %s110, 0
    %s112 = scalar_select %p111, %s110, 0
    %s113 = smul.u32 2, %s112
    %p114 = scmp.eq.s32.totalorder 0, 0
    // Predicated region
    $region14: #{masked_mse_loss.1} parent=1 // pred_check
      %p115 = pneg %p114
    $region15: #{masked_mse_loss.1} parent=1 // pred_check_branch
      %117 = sbr.rel (%p115) target = $region17
    $region16: #{masked_mse_loss.1} parent=1 // pred_region
      %118 = vst [vmem:[#allocation2] sm:$0xff] 0.0
      %119 = vst [vmem:[#allocation3] sm:$0xff] 0.0
    $region17: #{masked_mse_loss.1} parent=1 // pred_fallthru
      _
    %s120 = sadd.s32 0, 0
    %s121 = smul.u32 %s120, 16
    %s122 = ssub.s32 16, %s121
    %p123 = scmp.gt.s32.totalorder %s122, 0
    %s124 = scalar_select %p123, %s122, 0
    %p125 = scmp.lt.s32.totalorder %s124, 16
    %s126 = scalar_select %p125, %s124, 16
    %v127 = vlaneseq
    %v128 = vshrl.u32 %v127, 7
    %v129 = vadd.s32 %v128, 8
    %v130 = vstv %s126
    %vm131 = vcmp.lt.s32.totalorder %v128, %v130
    %vm132 = vcmp.lt.s32.totalorder %v129, %v130
    %v133 = vld [vmem:[%s109] sm:$0xff]
    %v134 = vld [vmem:[%s109 + $0x8] sm:$0xff]
    %vm135 = vcmp.ne.s32.totalorder %v133, 0
    %vm136 = vcmp.ne.s32.totalorder %v134, 0
    %vm137 = vmand %vm135, %vm131
    %vm138 = vmand %vm136, %vm132
    %v139 = vld [vmem:[%s85] sm:$0xff]
    %v140 = vld [vmem:[%s85 + $0x8] sm:$0xff]
    %v141 = vld [vmem:[%s97] sm:$0xff]
    %v142 = vld [vmem:[%s97 + $0x8] sm:$0xff]
    %v143 = vsub.f32 %v139, %v141
    %v144 = vsub.f32 %v140, %v142
    %v145 = vmul.f32 %v143, %v143
    %v146 = vmul.f32 %v144, %v144
    %v147 = vsel %vm137, %v145, 0.0
    %v148 = vsel %vm138, %v146, 0.0
    %v149 = vsel %vm137, 1, 0
    %v150 = vsel %vm138, 1, 0
    %v151 = vcvt.s32.f32 %v149
    %v152 = vcvt.s32.f32 %v150
    %v153 = vld [vmem:[#allocation2] sm:$0xff]
    %v154 = vadd.f32 %v147, %v148
    %v155 = vadd.f32 %v153, %v154
    %156 = vst [vmem:[#allocation2] sm:$0xff] %v155
    %v157 = vld [vmem:[#allocation3] sm:$0xff]
    %v158 = vadd.f32 %v151, %v152
    %v159 = vadd.f32 %v157, %v158
    %160 = vst [vmem:[#allocation3] sm:$0xff] %v159
    // Predicated region
    $region18: #{masked_mse_loss.1} parent=1 // pred_check
      %p161 = pneg %p114
    $region19: #{masked_mse_loss.1} parent=1 // pred_check_branch
      %163 = sbr.rel (%p161) target = $region21
    $region20: #{masked_mse_loss.1} parent=1 // pred_region
      %v164 = vld [vmem:[#allocation2] sm:$0xff]
      %165 = vadd.xlane.f32.xlu0 %v164
      %v166 = vpop.xlane.xlu0 %165
      %v167 = vrot.slane %v166, 4
      %v168 = vadd.f32 %v166, %v167
      %v169 = vrot.slane %v168, 2
      %v170 = vadd.f32 %v168, %v169
      %v171 = vrot.slane %v170, 1
      %v172 = vadd.f32 %v170, %v171
      %s173 = vtos %v172
      %v174 = vstv %s173
      %vm175 = vcmask 0
      %176 = vst.msk [vmem:[#allocation4] sm:$0x1] %vm175, %v174
      %v177 = vld [vmem:[#allocation3] sm:$0xff]
      %178 = vadd.xlane.f32.xlu0 %v177
      %v179 = vpop.xlane.xlu0 %178
      %v180 = vrot.slane %v179, 4
      %v181 = vadd.f32 %v179, %v180
      %v182 = vrot.slane %v181, 2
      %v183 = vadd.f32 %v181, %v182
      %v184 = vrot.slane %v183, 1
      %v185 = vadd.f32 %v183, %v184
      %s186 = vtos %v185
      %v187 = vstv %s186
      %188 = vst.msk [vmem:[#allocation6] sm:$0x1] %vm175, %v187
    $region21: #{masked_mse_loss.1} parent=1 // pred_fallthru
      _
    // Predicated region
    $region22: #{masked_mse_loss.1} parent=1 // pred_check
      _
    $region23: #{masked_mse_loss.1} parent=1 // pred_check_branch
      %190 = sbr.rel (0) target = $region25
    $region24: #{masked_mse_loss.1} parent=1 // pred_region
      %s192 = ssub.s32 16, 16
      %193 = vsyncadd [#allocation5], %s192
      %s195 = sshll.u32 [#allocation4], 4
      %s196 = int_to_ptr.vmem [resolvable:$true] %s195
      %198 = dma.vmem_to_hbm [thread:$0]  %s196, 16, %s3, [#allocation5]
    $region25: #{masked_mse_loss.1} parent=1 // pred_fallthru
      _
    // Predicated region
    $region26: #{masked_mse_loss.1} parent=1 // pred_check
      _
    $region27: #{masked_mse_loss.1} parent=1 // pred_check_branch
      %200 = sbr.rel (0) target = $region29
    $region28: #{masked_mse_loss.1} parent=1 // pred_region
      %s202 = ssub.s32 16, 16
      %203 = vsyncadd [#allocation7], %s202
      %s205 = sshll.u32 [#allocation6], 4
      %s206 = int_to_ptr.vmem [resolvable:$true] %s205
      %208 = dma.vmem_to_hbm [thread:$0]  %s206, 16, %s4, [#allocation7]
    $region29: #{masked_mse_loss.1} parent=1 // pred_fallthru
      _
    // Predicated region
    $region30: #{masked_mse_loss.1} parent=1 // pred_check
      _
    $region31: #{masked_mse_loss.1} parent=1 // pred_check_branch
      %210 = sbr.rel (0) target = $region33
    $region32: #{masked_mse_loss.1} parent=1 // pred_region
      %211 = dma.done [#allocation5], 16
    $region33: #{masked_mse_loss.1} parent=1 // pred_fallthru
      _
    // Predicated region
    $region34: #{masked_mse_loss.1} parent=1 // pred_check
      _
    $region35: #{masked_mse_loss.1} parent=1 // pred_check_branch
      %213 = sbr.rel (0) target = $region37
    $region36: #{masked_mse_loss.1} parent=1 // pred_region
      %214 = dma.done [#allocation7], 16
    $region37: #{masked_mse_loss.1} parent=1 // pred_fallthru
      _
    %215 = vsyncpa [#allocation5], 1
    %216 = vsyncpa [#allocation7], 1

</llo_original>
